<compile_context>
chip_gen: v6e
topology: v6e:2x2x1
jax: 0.10.0
libtpu: 0.0.40
codegen_flags: <defaults>
</compile_context>

<pallas_src>
import functools

import jax
import jax.numpy as jnp
from jax.experimental import pallas as pl
from jax.experimental.pallas import tpu as pltpu


def _radius_key_kernel(cutoff_sq, invalid_key,
                       bmin_r_ref, bmax_r_ref, bmin_c_ref, bmax_c_ref,
                       x_ref, y_ref, z_ref, xt_ref, yt_ref, zt_ref,
                       bcol_ref, brow_ref, key_ref):
    """One (TM, TN) tile of per-row neighbour sort keys.

    key[i, j] = j            if (j -> i) is an edge: same molecule, i != j,
                               ||pos_i - pos_j||^2 <= cutoff^2
              = invalid_key  otherwise (invalid_key == N_pad sorts last)
    """
    tm = x_ref.shape[0]
    tn = xt_ref.shape[1]
    i0 = pl.program_id(0) * tm
    j0 = pl.program_id(1) * tn

    # Per-block batch-id ranges (scalar-prefetched into SMEM).
    bmin_r = bmin_r_ref[pl.program_id(0)]
    bmax_r = bmax_r_ref[pl.program_id(0)]
    bmin_c = bmin_c_ref[pl.program_id(1)]
    bmax_c = bmax_c_ref[pl.program_id(1)]
    may_overlap = jnp.logical_and(bmax_r >= bmin_c, bmax_c >= bmin_r)

    col_ids = j0 + jax.lax.broadcasted_iota(jnp.int32, (1, tn), 1)   # (1, TN)

    @pl.when(jnp.logical_not(may_overlap))
    def _():
        # Cross-molecule tile: no edges possible -> store-only splat.
        key_ref[...] = jnp.full((tm, tn), invalid_key, jnp.int32)

    @pl.when(may_overlap)
    def _():
        # Squared distances on the VPU via rank-1 broadcast differences
        # (numerically stable, no MXU, no sqrt).
        dx = x_ref[...] - xt_ref[...]          # (TM,1)-(1,TN) -> (TM,TN)
        dy = y_ref[...] - yt_ref[...]
        dz = z_ref[...] - zt_ref[...]
        d2 = dx * dx + dy * dy + dz * dz

        valid = jnp.logical_and(bcol_ref[...] == brow_ref[...],
                                d2 <= jnp.float32(cutoff_sq))
        key = jnp.where(valid, col_ids, jnp.int32(invalid_key))
        key_ref[...] = key

        # Self-edge removal only on tiles that touch the diagonal.
        diag = jnp.logical_and(i0 < j0 + tn, j0 < i0 + tm)

        @pl.when(diag)
        def _():
            row_ids = i0 + jax.lax.broadcasted_iota(jnp.int32, (tm, 1), 0)
            key_ref[...] = jnp.where(row_ids == col_ids,
                                     jnp.int32(invalid_key), key)


def _pick_tile(n_pad, candidates):
    for c in candidates:
        if c <= n_pad and n_pad % c == 0:
            return c
    return n_pad


def _block_min_max(batch_pad, tile):
    b = batch_pad.reshape(-1, tile)
    return jnp.min(b, axis=1), jnp.max(b, axis=1)


def _pairwise_sort_keys(pos_pad, batch_pad, cutoff):
    """Returns (N_pad, N_pad) int32 sort keys; N_pad is a multiple of 128."""
    n_pad = pos_pad.shape[0]

    tm = _pick_tile(n_pad, (512, 256, 128))
    if n_pad // tm < 2:        # keep >=2 row blocks so megacore / v7x 2 TCs shard
        tm = max(8, n_pad // 2)
    tn = _pick_tile(n_pad, (2048, 1024, 512, 256, 128))
    grid = (n_pad // tm, n_pad // tn)
    # Output tile: tm*tn*4B <= 4 MiB; double-buffered well under the 32 MiB
    # scoped-VMEM default on all generations (incl. v7x's 64 MiB physical).

    x_col = pos_pad[:, 0:1]                     # (N_pad, 1)
    y_col = pos_pad[:, 1:2]
    z_col = pos_pad[:, 2:3]
    x_row = pos_pad[:, 0].reshape(1, n_pad)     # (1, N_pad)
    y_row = pos_pad[:, 1].reshape(1, n_pad)
    z_row = pos_pad[:, 2].reshape(1, n_pad)
    bcol = batch_pad.reshape(n_pad, 1)
    brow = batch_pad.reshape(1, n_pad)

    bmin_r, bmax_r = _block_min_max(batch_pad, tm)   # (grid_i,)
    bmin_c, bmax_c = _block_min_max(batch_pad, tn)   # (grid_j,)

    kernel = functools.partial(_radius_key_kernel, float(cutoff) ** 2, n_pad)

    row_map = lambda i, j, *_: (i, 0)
    col_map = lambda i, j, *_: (0, j)

    return pl.pallas_call(
        kernel,
        out_shape=jax.ShapeDtypeStruct((n_pad, n_pad), jnp.int32),
        grid_spec=pltpu.PrefetchScalarGridSpec(
            num_scalar_prefetch=4,
            grid=grid,
            in_specs=[
                pl.BlockSpec((tm, 1), row_map),   # x of row (target) atoms
                pl.BlockSpec((tm, 1), row_map),   # y
                pl.BlockSpec((tm, 1), row_map),   # z
                pl.BlockSpec((1, tn), col_map),   # x of col (source) atoms
                pl.BlockSpec((1, tn), col_map),   # y
                pl.BlockSpec((1, tn), col_map),   # z
                pl.BlockSpec((tm, 1), row_map),   # batch id (rows)
                pl.BlockSpec((1, tn), col_map),   # batch id (cols)
            ],
            out_specs=pl.BlockSpec((tm, tn), lambda i, j, *_: (i, j)),
        ),
        compiler_params=pltpu.CompilerParams(
            dimension_semantics=("parallel", "parallel")),
    )(bmin_r, bmax_r, bmin_c, bmax_c,
      x_col, y_col, z_col, x_row, y_row, z_row, bcol, brow)


def radius_interaction_graph(pos, batch, cutoff=10.0, max_num_neighbors=32):
    """JAX/Pallas analogue of RadiusInteractionGraph.forward.

    Returns a fixed-capacity edge list of size E_max = N * max_num_neighbors:
      edge_index : (2, E_max) int32   -- [source j, target i]; padded = (0, 0)
      edge_weight: (E_max,)   float32 -- ||pos[row] - pos[col]||; padded = 0
      edge_mask  : (E_max,)   bool    -- True for real edges
    Neighbour truncation keeps the k lowest-index ("first found") neighbours.
    """
    n = pos.shape[0]
    k = int(max_num_neighbors)
    n_pad = max(128, ((n + 127) // 128) * 128)     # lane-dense output slab

    pos_f = pos.astype(jnp.float32)
    pos_pad = jnp.pad(pos_f, ((0, n_pad - n), (0, 0)))
    # Padding atoms get batch id -1 so they never match a real atom.
    batch_pad = jnp.pad(batch.astype(jnp.int32), (0, n_pad - n),
                        constant_values=-1)

    keys = _pairwise_sort_keys(pos_pad, batch_pad, cutoff)   # (n_pad, n_pad)
    keys = keys[:n]                                          # (n, n_pad)

    # k lowest-index neighbours per target node.
    # TODO(synk): fuse this per-row compaction into the Pallas kernel (emit
    # (N, K) indices directly) to remove the remaining O(N^2) HBM read by
    # top_k; the per-row scatter needs K cross-lane reductions per tile.
    neg_keys, order = jax.lax.top_k(-keys, k)                # (n, k)
    nbr_valid = neg_keys > -n_pad

    src = order.reshape(-1).astype(jnp.int32)                # neighbour j
    dst = jnp.repeat(jnp.arange(n, dtype=jnp.int32), k)      # centre    i
    mask = nbr_valid.reshape(-1)
    src = jnp.where(mask, src, 0)
    dst = jnp.where(mask, dst, 0)

    # Exact edge weights recomputed for selected edges only (O(N*K*3)).
    diff = pos_f[dst] - pos_f[src]
    edge_weight = jnp.where(mask, jnp.sqrt(jnp.sum(diff * diff, axis=-1)),
                            jnp.float32(0.0))
    edge_index = jnp.stack([src, dst])           # row = source, col = target
    return edge_index, edge_weight, mask


if __name__ == "__main__":
    key = jax.random.PRNGKey(0)
    n_atoms = 64
    cutoff = 3.0
    pos = jax.random.uniform(key, (n_atoms, 3), jnp.float32, 0.0, 6.0)
    # Two molecules of 32 atoms each.
    batch = jnp.concatenate([
        jnp.zeros(n_atoms // 2, dtype=jnp.int32),
        jnp.ones(n_atoms // 2, dtype=jnp.int32),
    ])

    edge_index, edge_weight, edge_mask = radius_interaction_graph(
        pos, batch, cutoff=cutoff, max_num_neighbors=32)
    jax.block_until_ready((edge_index, edge_weight, edge_mask))

    # --- sanity checks -----------------------------------------------------
    row, col = edge_index            # row = source j, col = target i
    ref_w = jnp.where(edge_mask,
                      jnp.linalg.norm(pos[row] - pos[col], axis=-1), 0.0)
    assert jnp.allclose(ref_w, edge_weight, atol=1e-5)
    assert bool(jnp.all(jnp.where(edge_mask, edge_weight <= cutoff + 1e-6, True)))
    assert bool(jnp.all(jnp.where(edge_mask, batch[row] == batch[col], True)))
    assert bool(jnp.all(jnp.where(edge_mask, row != col, True)))

    # Exact edge-set check (k=32 > max 31 neighbours per 32-atom molecule, so
    # no truncation occurs): reconstruct adjacency and compare to dense ref.
    d2 = jnp.sum((pos[:, None, :] - pos[None, :, :]) ** 2, axis=-1)
    adj_ref = ((d2 <= cutoff ** 2)
               & (batch[:, None] == batch[None, :])
               & ~jnp.eye(n_atoms, dtype=bool))
    adj_got = jnp.zeros((n_atoms, n_atoms), jnp.int32)
    adj_got = adj_got.at[col, row].max(edge_mask.astype(jnp.int32))
    assert bool(jnp.all((adj_got == 1) == adj_ref))

    print("KERNEL_OK")
</pallas_src>

<mosaic_0001>
module attributes {stable_mosaic.version = 11 : i64} {
  func.func @_radius_key_kernel(%arg0: i32, %arg1: i32, %arg2: memref<2xi32, #tpu.memory_space<smem>>, %arg3: memref<2xi32, #tpu.memory_space<smem>>, %arg4: memref<1xi32, #tpu.memory_space<smem>>, %arg5: memref<1xi32, #tpu.memory_space<smem>>, %arg6: memref<64x1xf32, #tpu.memory_space<vmem>>, %arg7: memref<64x1xf32, #tpu.memory_space<vmem>>, %arg8: memref<64x1xf32, #tpu.memory_space<vmem>>, %arg9: memref<1x128xf32, #tpu.memory_space<vmem>>, %arg10: memref<1x128xf32, #tpu.memory_space<vmem>>, %arg11: memref<1x128xf32, #tpu.memory_space<vmem>>, %arg12: memref<64x1xi32, #tpu.memory_space<vmem>>, %arg13: memref<1x128xi32, #tpu.memory_space<vmem>>, %arg14: memref<64x128xi32, #tpu.memory_space<vmem>>) attributes {dimension_semantics = [#tpu.dimension_semantics<parallel>, #tpu.dimension_semantics<parallel>], iteration_bounds = array<i64: 2, 1>, scalar_prefetch = 4 : i64, scratch_operands = 0 : i64, tpu.core_type = #tpu.core_type<tc>, window_params = [{transform_indices = @transform_0, window_bounds = array<i64: 64, 1>}, {transform_indices = @transform_1, window_bounds = array<i64: 64, 1>}, {transform_indices = @transform_2, window_bounds = array<i64: 64, 1>}, {transform_indices = @transform_3, window_bounds = array<i64: 1, 128>}, {transform_indices = @transform_4, window_bounds = array<i64: 1, 128>}, {transform_indices = @transform_5, window_bounds = array<i64: 1, 128>}, {transform_indices = @transform_6, window_bounds = array<i64: 64, 1>}, {transform_indices = @transform_7, window_bounds = array<i64: 1, 128>}, {transform_indices = @transform_8, window_bounds = array<i64: 64, 128>}]} {
    %c64_i32 = arith.constant 64 : i32
    %0 = arith.muli %arg0, %c64_i32 : i32
    %c128_i32 = arith.constant 128 : i32
    %1 = arith.muli %arg1, %c128_i32 : i32
    %2 = arith.index_cast %arg0 : i32 to index
    %3 = memref.load %arg2[%2] : memref<2xi32, #tpu.memory_space<smem>>
    %4 = arith.index_cast %arg0 : i32 to index
    %5 = memref.load %arg3[%4] : memref<2xi32, #tpu.memory_space<smem>>
    %6 = arith.index_cast %arg1 : i32 to index
    %7 = memref.load %arg4[%6] : memref<1xi32, #tpu.memory_space<smem>>
    %8 = arith.index_cast %arg1 : i32 to index
    %9 = memref.load %arg5[%8] : memref<1xi32, #tpu.memory_space<smem>>
    %10 = arith.cmpi sge, %5, %7 : i32
    %11 = arith.cmpi sge, %9, %3 : i32
    %12 = arith.andi %10, %11 : i1
    %13 = tpu.iota {dimensions = array<i32: 1>} : vector<1x128xi32>
    %14 = vector.broadcast %1 : i32 to vector<1x128xi32>
    %15 = arith.addi %14, %13 : vector<1x128xi32>
    %true = arith.constant true
    %16 = arith.xori %12, %true : i1
    %17 = arith.extui %16 : i1 to i32
    %c0_i32 = arith.constant 0 : i32
    %18 = arith.cmpi ne, %17, %c0_i32 : i32
    scf.if %18 {
      %c128_i32_1 = arith.constant 128 : i32
      %21 = vector.broadcast %c128_i32_1 : i32 to vector<64x128xi32>
      %c0 = arith.constant 0 : index
      %c0_2 = arith.constant 0 : index
      %22 = vector.load %arg14[%c0, %c0_2] : memref<64x128xi32, #tpu.memory_space<vmem>>, vector<64x128xi32>
      tpu.vector_store %arg14[%c0, %c0_2], %21 {strides = array<i32>} : memref<64x128xi32, #tpu.memory_space<vmem>>, vector<64x128xi32>,
    } else {
    }
    %19 = arith.extui %12 : i1 to i32
    %c0_i32_0 = arith.constant 0 : i32
    %20 = arith.cmpi ne, %19, %c0_i32_0 : i32
    scf.if %20 {
      %c0 = arith.constant 0 : index
      %c0_1 = arith.constant 0 : index
      %21 = vector.load %arg6[%c0, %c0_1] : memref<64x1xf32, #tpu.memory_space<vmem>>, vector<64x1xf32>
      %c0_2 = arith.constant 0 : index
      %c0_3 = arith.constant 0 : index
      %22 = vector.load %arg9[%c0_2, %c0_3] : memref<1x128xf32, #tpu.memory_space<vmem>>, vector<1x128xf32>
      %23 = vector.broadcast %21 : vector<64x1xf32> to vector<64x128xf32>
      %24 = vector.broadcast %22 : vector<1x128xf32> to vector<64x128xf32>
      %25 = arith.subf %23, %24 : vector<64x128xf32>
      %c0_4 = arith.constant 0 : index
      %c0_5 = arith.constant 0 : index
      %26 = vector.load %arg7[%c0_4, %c0_5] : memref<64x1xf32, #tpu.memory_space<vmem>>, vector<64x1xf32>
      %c0_6 = arith.constant 0 : index
      %c0_7 = arith.constant 0 : index
      %27 = vector.load %arg10[%c0_6, %c0_7] : memref<1x128xf32, #tpu.memory_space<vmem>>, vector<1x128xf32>
      %28 = vector.broadcast %26 : vector<64x1xf32> to vector<64x128xf32>
      %29 = vector.broadcast %27 : vector<1x128xf32> to vector<64x128xf32>
      %30 = arith.subf %28, %29 : vector<64x128xf32>
      %c0_8 = arith.constant 0 : index
      %c0_9 = arith.constant 0 : index
      %31 = vector.load %arg8[%c0_8, %c0_9] : memref<64x1xf32, #tpu.memory_space<vmem>>, vector<64x1xf32>
      %c0_10 = arith.constant 0 : index
      %c0_11 = arith.constant 0 : index
      %32 = vector.load %arg11[%c0_10, %c0_11] : memref<1x128xf32, #tpu.memory_space<vmem>>, vector<1x128xf32>
      %33 = vector.broadcast %31 : vector<64x1xf32> to vector<64x128xf32>
      %34 = vector.broadcast %32 : vector<1x128xf32> to vector<64x128xf32>
      %35 = arith.subf %33, %34 : vector<64x128xf32>
      %36 = arith.mulf %25, %25 : vector<64x128xf32>
      %37 = arith.mulf %30, %30 : vector<64x128xf32>
      %38 = arith.addf %36, %37 : vector<64x128xf32>
      %39 = arith.mulf %35, %35 : vector<64x128xf32>
      %40 = arith.addf %38, %39 : vector<64x128xf32>
      %c0_12 = arith.constant 0 : index
      %c0_13 = arith.constant 0 : index
      %41 = vector.load %arg12[%c0_12, %c0_13] : memref<64x1xi32, #tpu.memory_space<vmem>>, vector<64x1xi32>
      %c0_14 = arith.constant 0 : index
      %c0_15 = arith.constant 0 : index
      %42 = vector.load %arg13[%c0_14, %c0_15] : memref<1x128xi32, #tpu.memory_space<vmem>>, vector<1x128xi32>
      %43 = vector.broadcast %41 : vector<64x1xi32> to vector<64x128xi32>
      %44 = vector.broadcast %42 : vector<1x128xi32> to vector<64x128xi32>
      %45 = arith.cmpi eq, %43, %44 : vector<64x128xi32>
      %cst = arith.constant 9.000000e+00 : f32
      %46 = vector.broadcast %cst : f32 to vector<64x128xf32>
      %47 = arith.cmpf ole, %40, %46 : vector<64x128xf32>
      %48 = arith.andi %45, %47 : vector<64x128xi1>
      %c128_i32_16 = arith.constant 128 : i32
      %49 = vector.shape_cast %15 : vector<1x128xi32> to vector<1x128xi32>
      %50 = vector.broadcast %49 : vector<1x128xi32> to vector<64x128xi32>
      %51 = vector.broadcast %c128_i32_16 : i32 to vector<64x128xi32>
      %52 = arith.select %48, %50, %51 : vector<64x128xi1>, vector<64x128xi32>
      %c0_17 = arith.constant 0 : index
      %c0_18 = arith.constant 0 : index
      %53 = vector.load %arg14[%c0_17, %c0_18] : memref<64x128xi32, #tpu.memory_space<vmem>>, vector<64x128xi32>
      tpu.vector_store %arg14[%c0_17, %c0_18], %52 {strides = array<i32>} : memref<64x128xi32, #tpu.memory_space<vmem>>, vector<64x128xi32>,
      %c128_i32_19 = arith.constant 128 : i32
      %54 = arith.addi %1, %c128_i32_19 : i32
      %55 = arith.cmpi slt, %0, %54 : i32
      %c64_i32_20 = arith.constant 64 : i32
      %56 = arith.addi %0, %c64_i32_20 : i32
      %57 = arith.cmpi slt, %1, %56 : i32
      %58 = arith.andi %55, %57 : i1
      %59 = arith.extui %58 : i1 to i32
      %c0_i32_21 = arith.constant 0 : i32
      %60 = arith.cmpi ne, %59, %c0_i32_21 : i32
      scf.if %60 {
        %61 = tpu.iota {dimensions = array<i32: 0>} : vector<64x1xi32>
        %62 = vector.broadcast %0 : i32 to vector<64x1xi32>
        %63 = arith.addi %62, %61 : vector<64x1xi32>
        %64 = vector.broadcast %63 : vector<64x1xi32> to vector<64x128xi32>
        %65 = vector.broadcast %15 : vector<1x128xi32> to vector<64x128xi32>
        %66 = arith.cmpi eq, %64, %65 : vector<64x128xi32>
        %c128_i32_22 = arith.constant 128 : i32
        %67 = vector.broadcast %c128_i32_22 : i32 to vector<64x128xi32>
        %68 = arith.select %66, %67, %52 : vector<64x128xi1>, vector<64x128xi32>
        %c0_23 = arith.constant 0 : index
        %c0_24 = arith.constant 0 : index
        %69 = vector.load %arg14[%c0_23, %c0_24] : memref<64x128xi32, #tpu.memory_space<vmem>>, vector<64x128xi32>
        tpu.vector_store %arg14[%c0_23, %c0_24], %68 {strides = array<i32>} : memref<64x128xi32, #tpu.memory_space<vmem>>, vector<64x128xi32>,
      } else {
      }
    } else {
    }
    return
  }
  func.func @transform_0(%arg0: i32, %arg1: i32, %arg2: memref<2xi32, #tpu.memory_space<smem>>, %arg3: memref<2xi32, #tpu.memory_space<smem>>, %arg4: memref<1xi32, #tpu.memory_space<smem>>, %arg5: memref<1xi32, #tpu.memory_space<smem>>) -> (i32, i32) {
    %c0_i32 = arith.constant 0 : i32
    %c0_i32_0 = arith.constant 0 : i32
    return %arg0, %c0_i32 : i32, i32
  }
  func.func @transform_1(%arg0: i32, %arg1: i32, %arg2: memref<2xi32, #tpu.memory_space<smem>>, %arg3: memref<2xi32, #tpu.memory_space<smem>>, %arg4: memref<1xi32, #tpu.memory_space<smem>>, %arg5: memref<1xi32, #tpu.memory_space<smem>>) -> (i32, i32) {
    %c0_i32 = arith.constant 0 : i32
    %c0_i32_0 = arith.constant 0 : i32
    return %arg0, %c0_i32 : i32, i32
  }
  func.func @transform_2(%arg0: i32, %arg1: i32, %arg2: memref<2xi32, #tpu.memory_space<smem>>, %arg3: memref<2xi32, #tpu.memory_space<smem>>, %arg4: memref<1xi32, #tpu.memory_space<smem>>, %arg5: memref<1xi32, #tpu.memory_space<smem>>) -> (i32, i32) {
    %c0_i32 = arith.constant 0 : i32
    %c0_i32_0 = arith.constant 0 : i32
    return %arg0, %c0_i32 : i32, i32
  }
  func.func @transform_3(%arg0: i32, %arg1: i32, %arg2: memref<2xi32, #tpu.memory_space<smem>>, %arg3: memref<2xi32, #tpu.memory_space<smem>>, %arg4: memref<1xi32, #tpu.memory_space<smem>>, %arg5: memref<1xi32, #tpu.memory_space<smem>>) -> (i32, i32) {
    %c0_i32 = arith.constant 0 : i32
    %c0_i32_0 = arith.constant 0 : i32
    return %c0_i32, %arg1 : i32, i32
  }
  func.func @transform_4(%arg0: i32, %arg1: i32, %arg2: memref<2xi32, #tpu.memory_space<smem>>, %arg3: memref<2xi32, #tpu.memory_space<smem>>, %arg4: memref<1xi32, #tpu.memory_space<smem>>, %arg5: memref<1xi32, #tpu.memory_space<smem>>) -> (i32, i32) {
    %c0_i32 = arith.constant 0 : i32
    %c0_i32_0 = arith.constant 0 : i32
    return %c0_i32, %arg1 : i32, i32
  }
  func.func @transform_5(%arg0: i32, %arg1: i32, %arg2: memref<2xi32, #tpu.memory_space<smem>>, %arg3: memref<2xi32, #tpu.memory_space<smem>>, %arg4: memref<1xi32, #tpu.memory_space<smem>>, %arg5: memref<1xi32, #tpu.memory_space<smem>>) -> (i32, i32) {
    %c0_i32 = arith.constant 0 : i32
    %c0_i32_0 = arith.constant 0 : i32
    return %c0_i32, %arg1 : i32, i32
  }
  func.func @transform_6(%arg0: i32, %arg1: i32, %arg2: memref<2xi32, #tpu.memory_space<smem>>, %arg3: memref<2xi32, #tpu.memory_space<smem>>, %arg4: memref<1xi32, #tpu.memory_space<smem>>, %arg5: memref<1xi32, #tpu.memory_space<smem>>) -> (i32, i32) {
    %c0_i32 = arith.constant 0 : i32
    %c0_i32_0 = arith.constant 0 : i32
    return %arg0, %c0_i32 : i32, i32
  }
  func.func @transform_7(%arg0: i32, %arg1: i32, %arg2: memref<2xi32, #tpu.memory_space<smem>>, %arg3: memref<2xi32, #tpu.memory_space<smem>>, %arg4: memref<1xi32, #tpu.memory_space<smem>>, %arg5: memref<1xi32, #tpu.memory_space<smem>>) -> (i32, i32) {
    %c0_i32 = arith.constant 0 : i32
    %c0_i32_0 = arith.constant 0 : i32
    return %c0_i32, %arg1 : i32, i32
  }
  func.func @transform_8(%arg0: i32, %arg1: i32, %arg2: memref<2xi32, #tpu.memory_space<smem>>, %arg3: memref<2xi32, #tpu.memory_space<smem>>, %arg4: memref<1xi32, #tpu.memory_space<smem>>, %arg5: memref<1xi32, #tpu.memory_space<smem>>) -> (i32, i32) {
    %c0_i32 = arith.constant 0 : i32
    return %arg0, %arg1 : i32, i32
  }
}

</mosaic_0001>

<llo_original>
// kernel: tpu_custom_call.1
$region0: #{tpu_custom_call.1}
  #allocation0 [shape = 'u32[]', space=smem, size = 0x4, offset = 0x4, fixed_abs, tag = 'smem constant byte address 0x4 - core index']
  #allocation1 [shape = 'u32[144,128]{1,0:T(1,128)}', space=vmem, size = 0x12000, scoped, tag = 'internal scratch']
  #allocation2 [shape = 's32[1]{0}', space=sflag, size = 0x4, scoped, tag = 'scoped memory for tpu_custom_call.1']
  #allocation3 [shape = 'u8[512]{0}', space=smem, size = 0x200, scoped, tag = 'prefetched SMEM operand 0']
  #allocation4 [shape = 'u8[512]{0}', space=smem, size = 0x200, scoped, tag = 'prefetched SMEM operand 1']
  #allocation5 [shape = 's32[1]{0:T(128)S(6)}', space=smem, size = 0x200, scoped, tag = 'prefetched SMEM operand 2']
  #allocation6 [shape = 's32[1]{0:T(128)S(6)}', space=smem, size = 0x200, scoped, tag = 'prefetched SMEM operand 3']
  %s0 = inlined_call_operand.vmem [shape: s32[2], index: 0, kind: input, shape index: {}]
  %s1 = inlined_call_operand.vmem [shape: s32[2], index: 1, kind: input, shape index: {}]
  %s2 = inlined_call_operand.<no memory space> [shape: s32[1], index: 2, kind: input, shape index: {}]
  %s3 = inlined_call_operand.<no memory space> [shape: s32[1], index: 3, kind: input, shape index: {}]
  %s4 = inlined_call_operand.vmem [shape: f32[128,1], index: 4, kind: input, shape index: {}]
  %s5 = inlined_call_operand.vmem [shape: f32[128,1], index: 5, kind: input, shape index: {}]
  %s6 = inlined_call_operand.vmem [shape: f32[128,1], index: 6, kind: input, shape index: {}]
  %s7 = inlined_call_operand.vmem [shape: f32[1,128], index: 7, kind: input, shape index: {}]
  %s8 = inlined_call_operand.vmem [shape: f32[1,128], index: 8, kind: input, shape index: {}]
  %s9 = inlined_call_operand.vmem [shape: f32[1,128], index: 9, kind: input, shape index: {}]
  %s10 = inlined_call_operand.vmem [shape: s32[128,1], index: 10, kind: input, shape index: {}]
  %s11 = inlined_call_operand.vmem [shape: s32[1,128], index: 11, kind: input, shape index: {}]
  %s12 = inlined_call_operand.hbm [shape: s32[128,128], index: 12, kind: output, shape index: {}]
  %s13 = sld [smem:[#allocation0]]
  $region77: #{tpu_custom_call.1} parent=0
    _
  %s15 = ssub.s32 1, %s13
  %s16 = scalar_select 0, %s15, %s13
  %s17 = sshll.u32 %s0, 4
  %s18 = int_to_ptr.vmem [resolvable:$true] %s17
  %20 = dma.vmem_to_smem %s18, 16, [#allocation3], [#allocation2]
  %s21 = sshll.u32 %s1, 4
  %s22 = int_to_ptr.vmem [resolvable:$true] %s21
  %24 = dma.vmem_to_smem %s22, 16, [#allocation4], [#allocation2]
  %25 = sst [smem:[#allocation5]] %s2
  %26 = sst [smem:[#allocation6]] %s3
  %27 = dma.done [#allocation2], 32
  %28 = sfence
  $region1: #{tpu_custom_call.1} parent=0
    #allocation7 [shape = 'u8[65536]{0}', space=vmem, size = 0x10000, scoped, tag = 'output window, operand 0']
    #allocation8 [shape = 's32[2]{0}', space=sflag, size = 0x8, scoped, tag = 'scoped memory for tpu_custom_call.1']
    %29 = vsyncpa [#allocation8], 0
    %s30 = scalar_lea.sflag [#allocation8], 1
    %31 = vsyncpa %s30, 0
    loop: start=0, step=1, limit=4
    $region2: #{tpu_custom_call.1} parent=1 // loop_pre_header
      _
    $region3: #{tpu_custom_call.1} parent=1 // loop_header
      %s33 = sphi 0, %s37
      %p34 = scmp.ge.s32.totalorder %s33, 4
      %s40 = sphi 0, %s52
      %s41 = sphi 0, %s48
      %s42 = sphi 0, %s40
      %s43 = sphi 0, %s41
      %s44 = sphi 0, %s42
      %s45 = sphi 0, %s43
      %s55 = sphi 0, %s57
      %s58 = sphi 0, %s55
      %s59 = sphi 0, %s58
      %s75 = sphi 0, %s59
      %s81 = sphi 0, %s83
      %s84 = sphi 0, %s81
      %s85 = sphi 0, %s84
      %s101 = sphi 0, %s85
      %s107 = sphi 0, %s109
      %s110 = sphi 0, %s107
      %s111 = sphi 0, %s110
      %s127 = sphi 0, %s111
      %s133 = sphi 0, %s135
      %s136 = sphi 0, %s133
      %s137 = sphi 0, %s136
      %s153 = sphi 0, %s137
      %s159 = sphi 0, %s161
      %s162 = sphi 0, %s159
      %s163 = sphi 0, %s162
      %s179 = sphi 0, %s163
      %s185 = sphi 0, %s187
      %s188 = sphi 0, %s185
      %s189 = sphi 0, %s188
      %s205 = sphi 0, %s189
      %s211 = sphi 0, %s213
      %s214 = sphi 0, %s211
      %s215 = sphi 0, %s214
      %s231 = sphi 0, %s215
      %s237 = sphi 0, %s239
      %s240 = sphi 0, %s237
      %s241 = sphi 0, %s240
      %s257 = sphi 0, %s241
      %s265 = sphi 0, %s267
      %s268 = sphi 0, %s265
      %s269 = sphi 0, %s268
      %s285 = sphi 0, %s269
    $region4: #{tpu_custom_call.1} parent=1 // loop_header_branch
      %36 = sbr.rel (%p34) target = $region8
    $region5: #{tpu_custom_call.1} parent=1 // loop_body
      %s38 = ssub.s32 %s33, 1
      %s39 = ssub.s32 %s33, 2
      %s46 = sadd.s32 1, %s41
      %p47 = scmp.ge.s32.totalorder %s46, 1
      %s48 = scalar_select %p47, 0, %s46
      %s49 = sadd.s32 1, %s40
      %s50 = scalar_select %p47, %s49, %s40
      %p51 = scmp.ge.s32.totalorder %s50, 2
      %s52 = scalar_select %p51, 0, %s50
      %s53 = ssub.s32 %s40, %s52
      %p54 = scmp.eq.s32.totalorder %s53, 0
      %s56 = sadd.s32 %s55, 1
      %s57 = scalar_select %p54, %s55, %s56
      %p60 = pneg %p54
      %p61 = scmp.eq.s32.totalorder %s33, 1
      %p62 = por %p60, %p61
      %p63 = scmp.ne.s32.totalorder %s55, %s58
      %p64 = scmp.eq.s32.totalorder %s33, 0
      %p65 = por %p63, %p64
      %p66 = scmp.ne.s32.totalorder %s55, %s58
      %p67 = scmp.eq.s32.totalorder %s38, 1
      %p68 = por %p66, %p67
      %p69 = scmp.ne.s32.totalorder %s58, %s59
      %p70 = scmp.eq.s32.totalorder %s38, 0
      %p71 = por %p69, %p70
      %p72 = scmp.ne.s32.totalorder %s58, %s59
      %p73 = scmp.eq.s32.totalorder %s39, 1
      %p74 = por %p72, %p73
      %p76 = scmp.ne.s32.totalorder %s59, %s75
      %p77 = scmp.eq.s32.totalorder %s39, 0
      %p78 = por %p76, %p77
      %s79 = ssub.s32 %s40, %s52
      %p80 = scmp.eq.s32.totalorder %s79, 0
      %s82 = sadd.s32 %s81, 1
      %s83 = scalar_select %p80, %s81, %s82
      %p86 = pneg %p80
      %p87 = scmp.eq.s32.totalorder %s33, 1
      %p88 = por %p86, %p87
      %p89 = scmp.ne.s32.totalorder %s81, %s84
      %p90 = scmp.eq.s32.totalorder %s33, 0
      %p91 = por %p89, %p90
      %p92 = scmp.ne.s32.totalorder %s81, %s84
      %p93 = scmp.eq.s32.totalorder %s38, 1
      %p94 = por %p92, %p93
      %p95 = scmp.ne.s32.totalorder %s84, %s85
      %p96 = scmp.eq.s32.totalorder %s38, 0
      %p97 = por %p95, %p96
      %p98 = scmp.ne.s32.totalorder %s84, %s85
      %p99 = scmp.eq.s32.totalorder %s39, 1
      %p100 = por %p98, %p99
      %p102 = scmp.ne.s32.totalorder %s85, %s101
      %p103 = scmp.eq.s32.totalorder %s39, 0
      %p104 = por %p102, %p103
      %s105 = ssub.s32 %s40, %s52
      %p106 = scmp.eq.s32.totalorder %s105, 0
      %s108 = sadd.s32 %s107, 1
      %s109 = scalar_select %p106, %s107, %s108
      %p112 = pneg %p106
      %p113 = scmp.eq.s32.totalorder %s33, 1
      %p114 = por %p112, %p113
      %p115 = scmp.ne.s32.totalorder %s107, %s110
      %p116 = scmp.eq.s32.totalorder %s33, 0
      %p117 = por %p115, %p116
      %p118 = scmp.ne.s32.totalorder %s107, %s110
      %p119 = scmp.eq.s32.totalorder %s38, 1
      %p120 = por %p118, %p119
      %p121 = scmp.ne.s32.totalorder %s110, %s111
      %p122 = scmp.eq.s32.totalorder %s38, 0
      %p123 = por %p121, %p122
      %p124 = scmp.ne.s32.totalorder %s110, %s111
      %p125 = scmp.eq.s32.totalorder %s39, 1
      %p126 = por %p124, %p125
      %p128 = scmp.ne.s32.totalorder %s111, %s127
      %p129 = scmp.eq.s32.totalorder %s39, 0
      %p130 = por %p128, %p129
      %s131 = ssub.s32 %s41, %s48
      %p132 = scmp.eq.s32.totalorder %s131, 0
      %s134 = sadd.s32 %s133, 1
      %s135 = scalar_select %p132, %s133, %s134
      %p138 = pneg %p132
      %p139 = scmp.eq.s32.totalorder %s33, 1
      %p140 = por %p138, %p139
      %p141 = scmp.ne.s32.totalorder %s133, %s136
      %p142 = scmp.eq.s32.totalorder %s33, 0
      %p143 = por %p141, %p142
      %p144 = scmp.ne.s32.totalorder %s133, %s136
      %p145 = scmp.eq.s32.totalorder %s38, 1
      %p146 = por %p144, %p145
      %p147 = scmp.ne.s32.totalorder %s136, %s137
      %p148 = scmp.eq.s32.totalorder %s38, 0
      %p149 = por %p147, %p148
      %p150 = scmp.ne.s32.totalorder %s136, %s137
      %p151 = scmp.eq.s32.totalorder %s39, 1
      %p152 = por %p150, %p151
      %p154 = scmp.ne.s32.totalorder %s137, %s153
      %p155 = scmp.eq.s32.totalorder %s39, 0
      %p156 = por %p154, %p155
      %s157 = ssub.s32 %s41, %s48
      %p158 = scmp.eq.s32.totalorder %s157, 0
      %s160 = sadd.s32 %s159, 1
      %s161 = scalar_select %p158, %s159, %s160
      %p164 = pneg %p158
      %p165 = scmp.eq.s32.totalorder %s33, 1
      %p166 = por %p164, %p165
      %p167 = scmp.ne.s32.totalorder %s159, %s162
      %p168 = scmp.eq.s32.totalorder %s33, 0
      %p169 = por %p167, %p168
      %p170 = scmp.ne.s32.totalorder %s159, %s162
      %p171 = scmp.eq.s32.totalorder %s38, 1
      %p172 = por %p170, %p171
      %p173 = scmp.ne.s32.totalorder %s162, %s163
      %p174 = scmp.eq.s32.totalorder %s38, 0
      %p175 = por %p173, %p174
      %p176 = scmp.ne.s32.totalorder %s162, %s163
      %p177 = scmp.eq.s32.totalorder %s39, 1
      %p178 = por %p176, %p177
      %p180 = scmp.ne.s32.totalorder %s163, %s179
      %p181 = scmp.eq.s32.totalorder %s39, 0
      %p182 = por %p180, %p181
      %s183 = ssub.s32 %s41, %s48
      %p184 = scmp.eq.s32.totalorder %s183, 0
      %s186 = sadd.s32 %s185, 1
      %s187 = scalar_select %p184, %s185, %s186
      %p190 = pneg %p184
      %p191 = scmp.eq.s32.totalorder %s33, 1
      %p192 = por %p190, %p191
      %p193 = scmp.ne.s32.totalorder %s185, %s188
      %p194 = scmp.eq.s32.totalorder %s33, 0
      %p195 = por %p193, %p194
      %p196 = scmp.ne.s32.totalorder %s185, %s188
      %p197 = scmp.eq.s32.totalorder %s38, 1
      %p198 = por %p196, %p197
      %p199 = scmp.ne.s32.totalorder %s188, %s189
      %p200 = scmp.eq.s32.totalorder %s38, 0
      %p201 = por %p199, %p200
      %p202 = scmp.ne.s32.totalorder %s188, %s189
      %p203 = scmp.eq.s32.totalorder %s39, 1
      %p204 = por %p202, %p203
      %p206 = scmp.ne.s32.totalorder %s189, %s205
      %p207 = scmp.eq.s32.totalorder %s39, 0
      %p208 = por %p206, %p207
      %s209 = ssub.s32 %s40, %s52
      %p210 = scmp.eq.s32.totalorder %s209, 0
      %s212 = sadd.s32 %s211, 1
      %s213 = scalar_select %p210, %s211, %s212
      %p216 = pneg %p210
      %p217 = scmp.eq.s32.totalorder %s33, 1
      %p218 = por %p216, %p217
      %p219 = scmp.ne.s32.totalorder %s211, %s214
      %p220 = scmp.eq.s32.totalorder %s33, 0
      %p221 = por %p219, %p220
      %p222 = scmp.ne.s32.totalorder %s211, %s214
      %p223 = scmp.eq.s32.totalorder %s38, 1
      %p224 = por %p222, %p223
      %p225 = scmp.ne.s32.totalorder %s214, %s215
      %p226 = scmp.eq.s32.totalorder %s38, 0
      %p227 = por %p225, %p226
      %p228 = scmp.ne.s32.totalorder %s214, %s215
      %p229 = scmp.eq.s32.totalorder %s39, 1
      %p230 = por %p228, %p229
      %p232 = scmp.ne.s32.totalorder %s215, %s231
      %p233 = scmp.eq.s32.totalorder %s39, 0
      %p234 = por %p232, %p233
      %s235 = ssub.s32 %s41, %s48
      %p236 = scmp.eq.s32.totalorder %s235, 0
      %s238 = sadd.s32 %s237, 1
      %s239 = scalar_select %p236, %s237, %s238
      %p242 = pneg %p236
      %p243 = scmp.eq.s32.totalorder %s33, 1
      %p244 = por %p242, %p243
      %p245 = scmp.ne.s32.totalorder %s237, %s240
      %p246 = scmp.eq.s32.totalorder %s33, 0
      %p247 = por %p245, %p246
      %p248 = scmp.ne.s32.totalorder %s237, %s240
      %p249 = scmp.eq.s32.totalorder %s38, 1
      %p250 = por %p248, %p249
      %p251 = scmp.ne.s32.totalorder %s240, %s241
      %p252 = scmp.eq.s32.totalorder %s38, 0
      %p253 = por %p251, %p252
      %p254 = scmp.ne.s32.totalorder %s240, %s241
      %p255 = scmp.eq.s32.totalorder %s39, 1
      %p256 = por %p254, %p255
      %p258 = scmp.ne.s32.totalorder %s241, %s257
      %p259 = scmp.eq.s32.totalorder %s39, 0
      %p260 = por %p258, %p259
      %s261 = ssub.s32 %s40, %s52
      %s262 = ssub.s32 %s41, %s48
      %s263 = sor.u32 %s261, %s262
      %p264 = scmp.eq.s32.totalorder %s263, 0
      %s266 = sadd.s32 %s265, 1
      %s267 = scalar_select %p264, %s265, %s266
      %p270 = pneg %p264
      %p271 = scmp.eq.s32.totalorder %s33, 1
      %p272 = por %p270, %p271
      %p273 = scmp.ne.s32.totalorder %s265, %s268
      %p274 = scmp.eq.s32.totalorder %s33, 0
      %p275 = por %p273, %p274
      %p276 = scmp.ne.s32.totalorder %s265, %s268
      %p277 = scmp.eq.s32.totalorder %s38, 1
      %p278 = por %p276, %p277
      %p279 = scmp.ne.s32.totalorder %s268, %s269
      %p280 = scmp.eq.s32.totalorder %s38, 0
      %p281 = por %p279, %p280
      %p282 = scmp.ne.s32.totalorder %s268, %s269
      %p283 = scmp.eq.s32.totalorder %s39, 1
      %p284 = por %p282, %p283
      %p286 = scmp.ne.s32.totalorder %s269, %s285
      %p287 = scmp.eq.s32.totalorder %s39, 0
      %p288 = por %p286, %p287
      %p289 = scmp.le.s32.totalorder 1, %s33
      %p290 = scmp.lt.s32.totalorder %s33, 3
      %p291 = pnand %p289, %p290
      %p292 = pneg %p291
      // Predicated region
      $region9: #{tpu_custom_call.1} parent=5 // pred_check
        _
      $region10: #{tpu_custom_call.1} parent=5 // pred_check_branch
        %294 = sbr.rel (%p291) target = $region12
      $region11: #{tpu_custom_call.1} parent=5 // pred_region
        %s295 = ssub.s32 %s33, 1
        // Predicated region
        $region13: #{tpu_custom_call.1} parent=11 // pred_check
          %p296 = pneg %p149
        $region14: #{tpu_custom_call.1} parent=11 // pred_check_branch
          %298 = sbr.rel (%p296) target = $region16
        $region15: #{tpu_custom_call.1} parent=11 // pred_region
          %p299 = scmp.lt.s32.totalorder %s43, 0
          %s300 = scalar_select %p299, %s43, 0
          %s301 = scalar_lea.vmem %s7, %s300
        $region16: #{tpu_custom_call.1} parent=11 // pred_fallthru
          _
        // Predicated region
        $region17: #{tpu_custom_call.1} parent=11 // pred_check
          %p302 = pneg %p175
        $region18: #{tpu_custom_call.1} parent=11 // pred_check_branch
          %304 = sbr.rel (%p302) target = $region20
        $region19: #{tpu_custom_call.1} parent=11 // pred_region
          %p305 = scmp.lt.s32.totalorder %s43, 0
          %s306 = scalar_select %p305, %s43, 0
          %s307 = scalar_lea.vmem %s8, %s306
        $region20: #{tpu_custom_call.1} parent=11 // pred_fallthru
          _
        // Predicated region
        $region21: #{tpu_custom_call.1} parent=11 // pred_check
          %p308 = pneg %p201
        $region22: #{tpu_custom_call.1} parent=11 // pred_check_branch
          %310 = sbr.rel (%p308) target = $region24
        $region23: #{tpu_custom_call.1} parent=11 // pred_region
          %p311 = scmp.lt.s32.totalorder %s43, 0
          %s312 = scalar_select %p311, %s43, 0
          %s313 = scalar_lea.vmem %s9, %s312
        $region24: #{tpu_custom_call.1} parent=11 // pred_fallthru
          _
        // Predicated region
        $region25: #{tpu_custom_call.1} parent=11 // pred_check
          %p314 = pneg %p253
        $region26: #{tpu_custom_call.1} parent=11 // pred_check_branch
          %316 = sbr.rel (%p314) target = $region28
        $region27: #{tpu_custom_call.1} parent=11 // pred_region
          %p317 = scmp.lt.s32.totalorder %s43, 0
          %s318 = scalar_select %p317, %s43, 0
          %s319 = scalar_lea.vmem %s11, %s318
        $region28: #{tpu_custom_call.1} parent=11 // pred_fallthru
          _
      $region12: #{tpu_custom_call.1} parent=5 // pred_fallthru
        _
      %p320 = scmp.lt.s32.totalorder %s33, 2
      // Predicated region
      $region29: #{tpu_custom_call.1} parent=5 // pred_check
        %p321 = pneg %p320
      $region30: #{tpu_custom_call.1} parent=5 // pred_check_branch
        %323 = sbr.rel (%p321) target = $region32
      $region31: #{tpu_custom_call.1} parent=5 // pred_region
        // Predicated region
        $region33: #{tpu_custom_call.1} parent=31 // pred_check
          %p324 = pneg %p65
        $region34: #{tpu_custom_call.1} parent=31 // pred_check_branch
          %326 = sbr.rel (%p324) target = $region36
        $region35: #{tpu_custom_call.1} parent=31 // pred_region
          %s327 = smul.u32 8, %s40
          %p328 = scmp.lt.s32.totalorder %s327, 15
          %s329 = scalar_select %p328, %s327, 15
          %s330 = smul.addr %s329, 8
          %s331 = scalar_lea.vmem %s4, %s330
          %s332 = smul.u32 8, %s40
        $region36: #{tpu_custom_call.1} parent=31 // pred_fallthru
          _
        // Predicated region
        $region37: #{tpu_custom_call.1} parent=31 // pred_check
          %p333 = pneg %p91
        $region38: #{tpu_custom_call.1} parent=31 // pred_check_branch
          %335 = sbr.rel (%p333) target = $region40
        $region39: #{tpu_custom_call.1} parent=31 // pred_region
          %s336 = smul.u32 8, %s40
          %p337 = scmp.lt.s32.totalorder %s336, 15
          %s338 = scalar_select %p337, %s336, 15
          %s339 = smul.addr %s338, 8
          %s340 = scalar_lea.vmem %s5, %s339
          %s341 = smul.u32 8, %s40
        $region40: #{tpu_custom_call.1} parent=31 // pred_fallthru
          _
        // Predicated region
        $region41: #{tpu_custom_call.1} parent=31 // pred_check
          %p342 = pneg %p117
        $region42: #{tpu_custom_call.1} parent=31 // pred_check_branch
          %344 = sbr.rel (%p342) target = $region44
        $region43: #{tpu_custom_call.1} parent=31 // pred_region
          %s345 = smul.u32 8, %s40
          %p346 = scmp.lt.s32.totalorder %s345, 15
          %s347 = scalar_select %p346, %s345, 15
          %s348 = smul.addr %s347, 8
          %s349 = scalar_lea.vmem %s6, %s348
          %s350 = smul.u32 8, %s40
        $region44: #{tpu_custom_call.1} parent=31 // pred_fallthru
          _
        // Predicated region
        $region45: #{tpu_custom_call.1} parent=31 // pred_check
          %p351 = pneg %p221
        $region46: #{tpu_custom_call.1} parent=31 // pred_check_branch
          %353 = sbr.rel (%p351) target = $region48
        $region47: #{tpu_custom_call.1} parent=31 // pred_region
          %s354 = smul.u32 8, %s40
          %p355 = scmp.lt.s32.totalorder %s354, 15
          %s356 = scalar_select %p355, %s354, 15
          %s357 = smul.addr %s356, 8
          %s358 = scalar_lea.vmem %s10, %s357
          %s359 = smul.u32 8, %s40
        $region48: #{tpu_custom_call.1} parent=31 // pred_fallthru
          _
      $region32: #{tpu_custom_call.1} parent=5 // pred_fallthru
        _
      %p360 = scmp.le.s32.totalorder 1, %s33
      %p361 = scmp.lt.s32.totalorder %s33, 3
      %p362 = pnand %p360, %p361
      %p363 = pneg %p362
      // Predicated region
      $region49: #{tpu_custom_call.1} parent=5 // pred_check
        _
      $region50: #{tpu_custom_call.1} parent=5 // pred_check_branch
        %365 = sbr.rel (%p362) target = $region52
      $region51: #{tpu_custom_call.1} parent=5 // pred_region
        %s366 = ssub.s32 %s33, 1
        %s367 = smul.u32 8, %s42
        %p368 = scmp.lt.s32.totalorder %s367, 15
        %s369 = scalar_select %p368, %s367, 15
        %s370 = smul.addr %s369, 8
        %s371 = scalar_lea.vmem %s4, %s370
        %p372 = pneg %p71
        %p373 = pneg %p68
        %s374 = smul.u32 8, %s42
        %p375 = scmp.lt.s32.totalorder %s374, 15
        %s376 = scalar_select %p375, %s374, 15
        %s377 = smul.addr %s376, 8
        %s378 = scalar_lea.vmem %s5, %s377
        %p379 = pneg %p97
        %p380 = pneg %p94
        %s381 = smul.u32 8, %s42
        %p382 = scmp.lt.s32.totalorder %s381, 15
        %s383 = scalar_select %p382, %s381, 15
        %s384 = smul.addr %s383, 8
        %s385 = scalar_lea.vmem %s6, %s384
        %p386 = pneg %p123
        %p387 = pneg %p120
        %p388 = scmp.lt.s32.totalorder %s43, 0
        %s389 = scalar_select %p388, %s43, 0
        %s390 = scalar_lea.vmem %s7, %s389
        %p391 = pneg %p149
        %p392 = pneg %p146
        %p393 = scmp.lt.s32.totalorder %s43, 0
        %s394 = scalar_select %p393, %s43, 0
        %s395 = scalar_lea.vmem %s8, %s394
        %p396 = pneg %p175
        %p397 = pneg %p172
        %p398 = scmp.lt.s32.totalorder %s43, 0
        %s399 = scalar_select %p398, %s43, 0
        %s400 = scalar_lea.vmem %s9, %s399
        %p401 = pneg %p201
        %p402 = pneg %p198
        %s403 = smul.u32 8, %s42
        %p404 = scmp.lt.s32.totalorder %s403, 15
        %s405 = scalar_select %p404, %s403, 15
        %s406 = smul.addr %s405, 8
        %s407 = scalar_lea.vmem %s10, %s406
        %p408 = pneg %p227
        %p409 = pneg %p224
        %p410 = scmp.lt.s32.totalorder %s43, 0
        %s411 = scalar_select %p410, %s43, 0
        %s412 = scalar_lea.vmem %s11, %s411
        %p413 = pneg %p253
        %p414 = pneg %p250
        %p415 = pneg %p281
        %p416 = pneg %p278
        %s417 = sand.u32 %s268, 1
        %s418 = scalar_lea.sflag [#allocation8], %s417
        %s419 = sand.u32 %s268, 1
        %s420 = smul.addr %s419, 64
        %s421 = scalar_lea.vmem [#allocation7], %s420
        %s422 = smul.u32 8, %s42
        %p423 = scmp.lt.s32.totalorder %s422, 15
        %s424 = scalar_select %p423, %s422, 15
        %s425 = smul.addr %s424, 8
        %s426 = scalar_lea.vmem %s4, %s425
        %s427 = smul.u32 8, %s42
        %s428 = smul.u32 8, %s42
        %p429 = scmp.lt.s32.totalorder %s428, 15
        %s430 = scalar_select %p429, %s428, 15
        %s431 = smul.addr %s430, 8
        %s432 = scalar_lea.vmem %s5, %s431
        %s433 = smul.u32 8, %s42
        %s434 = smul.u32 8, %s42
        %p435 = scmp.lt.s32.totalorder %s434, 15
        %s436 = scalar_select %p435, %s434, 15
        %s437 = smul.addr %s436, 8
        %s438 = scalar_lea.vmem %s6, %s437
        %s439 = smul.u32 8, %s42
        %p440 = scmp.lt.s32.totalorder %s43, 0
        %s441 = scalar_select %p440, %s43, 0
        %s442 = scalar_lea.vmem %s7, %s441
        %p443 = scmp.lt.s32.totalorder %s43, 0
        %s444 = scalar_select %p443, %s43, 0
        %s445 = scalar_lea.vmem %s8, %s444
        %p446 = scmp.lt.s32.totalorder %s43, 0
        %s447 = scalar_select %p446, %s43, 0
        %s448 = scalar_lea.vmem %s9, %s447
        %s449 = smul.u32 8, %s42
        %p450 = scmp.lt.s32.totalorder %s449, 15
        %s451 = scalar_select %p450, %s449, 15
        %s452 = smul.addr %s451, 8
        %s453 = scalar_lea.vmem %s10, %s452
        %s454 = smul.u32 8, %s42
        %p455 = scmp.lt.s32.totalorder %s43, 0
        %s456 = scalar_select %p455, %s43, 0
        %s457 = scalar_lea.vmem %s11, %s456
        %s458 = smul.u32 8, %s42
        %s459 = smul.u32 %s42, 64
        %s460 = smul.u32 %s43, 128
        %s461 = sld [smem:[#allocation3 + %s42]]
        %s462 = sld [smem:[#allocation4 + %s42]]
        %s463 = sld [smem:[#allocation5 + %s43]]
        %s464 = sld [smem:[#allocation6 + %s43]]
        %p465 = scmp.ge.s32.totalorder %s462, %s463
        %p466 = scmp.ge.s32.totalorder %s464, %s461
        %p467 = pnand %p465, %p466
        %p468 = pneg %p467
        %v469 = vlaneseq
        %v470 = vand.u32 %v469, 127
        %v471 = vstv %s460
        %v472 = vadd.s32 %v471, %v470
        // Predicated region
        $region53: #{tpu_custom_call.1} parent=51 // pred_check
          _
        $region54: #{tpu_custom_call.1} parent=51 // pred_check_branch
          %474 = sbr.rel (%p467) target = $region56
        $region55: #{tpu_custom_call.1} parent=51 // pred_region
          %v475 = vld [vmem:[%s426] sm:$0xff]
          %v476 = vld [vmem:[%s426 + $0x8] sm:$0xff]
          %v477 = vld [vmem:[%s426 + $0x10] sm:$0xff]
          %v478 = vld [vmem:[%s426 + $0x18] sm:$0xff]
          %v479 = vld [vmem:[%s426 + $0x20] sm:$0xff]
          %v480 = vld [vmem:[%s426 + $0x28] sm:$0xff]
          %v481 = vld [vmem:[%s426 + $0x30] sm:$0xff]
          %v482 = vld [vmem:[%s426 + $0x38] sm:$0xff]
          %v483 = vld [vmem:[%s442] sm:$0x1]
          %485 = vset.pattern.permute.xlu0 0
          %486 = vperm.xlu0 %485, %v475
          %v487 = vpop.permute.xlu0 %486
          %490 = vset.pattern.permute.xlu0 0
          %491 = vperm.xlu0 %490, %v476
          %v492 = vpop.permute.xlu0 %491
          %495 = vset.pattern.permute.xlu0 0
          %496 = vperm.xlu0 %495, %v477
          %v497 = vpop.permute.xlu0 %496
          %500 = vset.pattern.permute.xlu0 0
          %501 = vperm.xlu0 %500, %v478
          %v502 = vpop.permute.xlu0 %501
          %505 = vset.pattern.permute.xlu0 0
          %506 = vperm.xlu0 %505, %v479
          %v507 = vpop.permute.xlu0 %506
          %510 = vset.pattern.permute.xlu0 0
          %511 = vperm.xlu0 %510, %v480
          %v512 = vpop.permute.xlu0 %511
          %515 = vset.pattern.permute.xlu0 0
          %516 = vperm.xlu0 %515, %v481
          %v517 = vpop.permute.xlu0 %516
          %520 = vset.pattern.permute.xlu0 0
          %521 = vperm.xlu0 %520, %v482
          %v522 = vpop.permute.xlu0 %521
          %v525 = vlaneseq
          %v526 = vshrl.u32 %v525, 7
          %v527 = vsub.s32 0, %v526
          %v528 = vrot.slane %v483, %v527
          %v530 = vsub.f32 %v487, %v528
          %v531 = vsub.f32 %v492, %v528
          %v532 = vsub.f32 %v497, %v528
          %v533 = vsub.f32 %v502, %v528
          %v534 = vsub.f32 %v507, %v528
          %v535 = vsub.f32 %v512, %v528
          %v536 = vsub.f32 %v517, %v528
          %v537 = vsub.f32 %v522, %v528
          %v538 = vld [vmem:[%s432] sm:$0xff]
          %v539 = vld [vmem:[%s432 + $0x8] sm:$0xff]
          %v540 = vld [vmem:[%s432 + $0x10] sm:$0xff]
          %v541 = vld [vmem:[%s432 + $0x18] sm:$0xff]
          %v542 = vld [vmem:[%s432 + $0x20] sm:$0xff]
          %v543 = vld [vmem:[%s432 + $0x28] sm:$0xff]
          %v544 = vld [vmem:[%s432 + $0x30] sm:$0xff]
          %v545 = vld [vmem:[%s432 + $0x38] sm:$0xff]
          %v546 = vld [vmem:[%s445] sm:$0x1]
          %548 = vset.pattern.permute.xlu0 0
          %549 = vperm.xlu0 %548, %v538
          %v550 = vpop.permute.xlu0 %549
          %553 = vset.pattern.permute.xlu0 0
          %554 = vperm.xlu0 %553, %v539
          %v555 = vpop.permute.xlu0 %554
          %558 = vset.pattern.permute.xlu0 0
          %559 = vperm.xlu0 %558, %v540
          %v560 = vpop.permute.xlu0 %559
          %563 = vset.pattern.permute.xlu0 0
          %564 = vperm.xlu0 %563, %v541
          %v565 = vpop.permute.xlu0 %564
          %568 = vset.pattern.permute.xlu0 0
          %569 = vperm.xlu0 %568, %v542
          %v570 = vpop.permute.xlu0 %569
          %573 = vset.pattern.permute.xlu0 0
          %574 = vperm.xlu0 %573, %v543
          %v575 = vpop.permute.xlu0 %574
          %578 = vset.pattern.permute.xlu0 0
          %579 = vperm.xlu0 %578, %v544
          %v580 = vpop.permute.xlu0 %579
          %583 = vset.pattern.permute.xlu0 0
          %584 = vperm.xlu0 %583, %v545
          %v585 = vpop.permute.xlu0 %584
          %v588 = vlaneseq
          %v589 = vshrl.u32 %v588, 7
          %v590 = vsub.s32 0, %v589
          %v591 = vrot.slane %v546, %v590
          %v593 = vsub.f32 %v550, %v591
          %v594 = vsub.f32 %v555, %v591
          %v595 = vsub.f32 %v560, %v591
          %v596 = vsub.f32 %v565, %v591
          %v597 = vsub.f32 %v570, %v591
          %v598 = vsub.f32 %v575, %v591
          %v599 = vsub.f32 %v580, %v591
          %v600 = vsub.f32 %v585, %v591
          %v601 = vld [vmem:[%s438] sm:$0xff]
          %v602 = vld [vmem:[%s438 + $0x8] sm:$0xff]
          %v603 = vld [vmem:[%s438 + $0x10] sm:$0xff]
          %v604 = vld [vmem:[%s438 + $0x18] sm:$0xff]
          %v605 = vld [vmem:[%s438 + $0x20] sm:$0xff]
          %v606 = vld [vmem:[%s438 + $0x28] sm:$0xff]
          %v607 = vld [vmem:[%s438 + $0x30] sm:$0xff]
          %v608 = vld [vmem:[%s438 + $0x38] sm:$0xff]
          %v609 = vld [vmem:[%s448] sm:$0x1]
          %611 = vset.pattern.permute.xlu0 0
          %612 = vperm.xlu0 %611, %v601
          %v613 = vpop.permute.xlu0 %612
          %616 = vset.pattern.permute.xlu0 0
          %617 = vperm.xlu0 %616, %v602
          %v618 = vpop.permute.xlu0 %617
          %621 = vset.pattern.permute.xlu0 0
          %622 = vperm.xlu0 %621, %v603
          %v623 = vpop.permute.xlu0 %622
          %626 = vset.pattern.permute.xlu0 0
          %627 = vperm.xlu0 %626, %v604
          %v628 = vpop.permute.xlu0 %627
          %631 = vset.pattern.permute.xlu0 0
          %632 = vperm.xlu0 %631, %v605
          %v633 = vpop.permute.xlu0 %632
          %636 = vset.pattern.permute.xlu0 0
          %637 = vperm.xlu0 %636, %v606
          %v638 = vpop.permute.xlu0 %637
          %641 = vset.pattern.permute.xlu0 0
          %642 = vperm.xlu0 %641, %v607
          %v643 = vpop.permute.xlu0 %642
          %646 = vset.pattern.permute.xlu0 0
          %647 = vperm.xlu0 %646, %v608
          %v648 = vpop.permute.xlu0 %647
          %v651 = vlaneseq
          %v652 = vshrl.u32 %v651, 7
          %v653 = vsub.s32 0, %v652
          %v654 = vrot.slane %v609, %v653
          %v656 = vsub.f32 %v613, %v654
          %v657 = vsub.f32 %v618, %v654
          %v658 = vsub.f32 %v623, %v654
          %v659 = vsub.f32 %v628, %v654
          %v660 = vsub.f32 %v633, %v654
          %v661 = vsub.f32 %v638, %v654
          %v662 = vsub.f32 %v643, %v654
          %v663 = vsub.f32 %v648, %v654
          %v664 = vmul.f32 %v530, %v530
          %v665 = vmul.f32 %v531, %v531
          %v666 = vmul.f32 %v532, %v532
          %v667 = vmul.f32 %v533, %v533
          %v668 = vmul.f32 %v534, %v534
          %v669 = vmul.f32 %v535, %v535
          %v670 = vmul.f32 %v536, %v536
          %v671 = vmul.f32 %v537, %v537
          %v672 = vmul.f32 %v593, %v593
          %v673 = vmul.f32 %v594, %v594
          %v674 = vmul.f32 %v595, %v595
          %v675 = vmul.f32 %v596, %v596
          %v676 = vmul.f32 %v597, %v597
          %v677 = vmul.f32 %v598, %v598
          %v678 = vmul.f32 %v599, %v599
          %v679 = vmul.f32 %v600, %v600
          %v680 = vadd.f32 %v664, %v672
          %v681 = vadd.f32 %v665, %v673
          %v682 = vadd.f32 %v666, %v674
          %v683 = vadd.f32 %v667, %v675
          %v684 = vadd.f32 %v668, %v676
          %v685 = vadd.f32 %v669, %v677
          %v686 = vadd.f32 %v670, %v678
          %v687 = vadd.f32 %v671, %v679
          %v688 = vmul.f32 %v656, %v656
          %v689 = vmul.f32 %v657, %v657
          %v690 = vmul.f32 %v658, %v658
          %v691 = vmul.f32 %v659, %v659
          %v692 = vmul.f32 %v660, %v660
          %v693 = vmul.f32 %v661, %v661
          %v694 = vmul.f32 %v662, %v662
          %v695 = vmul.f32 %v663, %v663
          %v696 = vadd.f32 %v680, %v688
          %v697 = vadd.f32 %v681, %v689
          %v698 = vadd.f32 %v682, %v690
          %v699 = vadd.f32 %v683, %v691
          %v700 = vadd.f32 %v684, %v692
          %v701 = vadd.f32 %v685, %v693
          %v702 = vadd.f32 %v686, %v694
          %v703 = vadd.f32 %v687, %v695
          %v704 = vld [vmem:[%s453] sm:$0xff]
          %v705 = vld [vmem:[%s453 + $0x8] sm:$0xff]
          %v706 = vld [vmem:[%s453 + $0x10] sm:$0xff]
          %v707 = vld [vmem:[%s453 + $0x18] sm:$0xff]
          %v708 = vld [vmem:[%s453 + $0x20] sm:$0xff]
          %v709 = vld [vmem:[%s453 + $0x28] sm:$0xff]
          %v710 = vld [vmem:[%s453 + $0x30] sm:$0xff]
          %v711 = vld [vmem:[%s453 + $0x38] sm:$0xff]
          %v712 = vld [vmem:[%s457] sm:$0x1]
          %713 = vset.pattern.permute.xlu0 0
          %714 = vperm.xlu0 %713, %v704
          %v715 = vpop.permute.xlu0 %714
          %716 = vset.pattern.permute.xlu0 0
          %717 = vperm.xlu0 %716, %v705
          %v718 = vpop.permute.xlu0 %717
          %719 = vset.pattern.permute.xlu0 0
          %720 = vperm.xlu0 %719, %v706
          %v721 = vpop.permute.xlu0 %720
          %722 = vset.pattern.permute.xlu0 0
          %723 = vperm.xlu0 %722, %v707
          %v724 = vpop.permute.xlu0 %723
          %725 = vset.pattern.permute.xlu0 0
          %726 = vperm.xlu0 %725, %v708
          %v727 = vpop.permute.xlu0 %726
          %728 = vset.pattern.permute.xlu0 0
          %729 = vperm.xlu0 %728, %v709
          %v730 = vpop.permute.xlu0 %729
          %731 = vset.pattern.permute.xlu0 0
          %732 = vperm.xlu0 %731, %v710
          %v733 = vpop.permute.xlu0 %732
          %734 = vset.pattern.permute.xlu0 0
          %735 = vperm.xlu0 %734, %v711
          %v736 = vpop.permute.xlu0 %735
          %v737 = vlaneseq
          %v738 = vshrl.u32 %v737, 7
          %v739 = vsub.s32 0, %v738
          %v740 = vrot.slane %v712, %v739
          %vm741 = vcmp.eq.s32.totalorder %v715, %v740
          %vm742 = vcmp.eq.s32.totalorder %v718, %v740
          %vm743 = vcmp.eq.s32.totalorder %v721, %v740
          %vm744 = vcmp.eq.s32.totalorder %v724, %v740
          %vm745 = vcmp.eq.s32.totalorder %v727, %v740
          %vm746 = vcmp.eq.s32.totalorder %v730, %v740
          %vm747 = vcmp.eq.s32.totalorder %v733, %v740
          %vm748 = vcmp.eq.s32.totalorder %v736, %v740
          %vm749 = vcmp.le.f32.partialorder %v696, 9.0
          %vm750 = vcmp.le.f32.partialorder %v697, 9.0
          %vm751 = vcmp.le.f32.partialorder %v698, 9.0
          %vm752 = vcmp.le.f32.partialorder %v699, 9.0
          %vm753 = vcmp.le.f32.partialorder %v700, 9.0
          %vm754 = vcmp.le.f32.partialorder %v701, 9.0
          %vm755 = vcmp.le.f32.partialorder %v702, 9.0
          %vm756 = vcmp.le.f32.partialorder %v703, 9.0
          %vm757 = vmand %vm741, %vm749
          %vm758 = vmand %vm742, %vm750
          %vm759 = vmand %vm743, %vm751
          %vm760 = vmand %vm744, %vm752
          %vm761 = vmand %vm745, %vm753
          %vm762 = vmand %vm746, %vm754
          %vm763 = vmand %vm747, %vm755
          %vm764 = vmand %vm748, %vm756
          %v765 = vsel %vm757, %v472, 128
          %v766 = vsel %vm758, %v472, 128
          %v767 = vsel %vm759, %v472, 128
          %v768 = vsel %vm760, %v472, 128
          %v769 = vsel %vm761, %v472, 128
          %v770 = vsel %vm762, %v472, 128
          %v771 = vsel %vm763, %v472, 128
          %v772 = vsel %vm764, %v472, 128
          %773 = vst [vmem:[%s421] sm:$0xff] %v765
          %774 = vst [vmem:[%s421 + $0x8] sm:$0xff] %v766
          %775 = vst [vmem:[%s421 + $0x10] sm:$0xff] %v767
          %776 = vst [vmem:[%s421 + $0x18] sm:$0xff] %v768
          %777 = vst [vmem:[%s421 + $0x20] sm:$0xff] %v769
          %778 = vst [vmem:[%s421 + $0x28] sm:$0xff] %v770
          %779 = vst [vmem:[%s421 + $0x30] sm:$0xff] %v771
          %780 = vst [vmem:[%s421 + $0x38] sm:$0xff] %v772
          %s781 = sadd.s32 %s460, 128
          %p782 = scmp.lt.s32.totalorder %s459, %s781
          %s783 = sadd.s32 %s459, 64
          %p784 = scmp.lt.s32.totalorder %s460, %s783
          %p785 = pnand %p782, %p784
          %p786 = pneg %p785
          // Predicated region
          $region57: #{tpu_custom_call.1} parent=55 // pred_check
            _
          $region58: #{tpu_custom_call.1} parent=55 // pred_check_branch
            %788 = sbr.rel (%p785) target = $region60
          $region59: #{tpu_custom_call.1} parent=55 // pred_region
            %v789 = vlaneseq
            %v790 = vshrl.u32 %v789, 7
            %v791 = vadd.s32 %v790, 8
            %v792 = vadd.s32 %v790, 16
            %v793 = vadd.s32 %v790, 24
            %v794 = vadd.s32 %v790, 32
            %v795 = vadd.s32 %v790, 40
            %v796 = vadd.s32 %v790, 48
            %v797 = vadd.s32 %v790, 56
            %v798 = vstv %s459
            %v799 = vadd.s32 %v798, %v790
            %v800 = vadd.s32 %v798, %v791
            %v801 = vadd.s32 %v798, %v792
            %v802 = vadd.s32 %v798, %v793
            %v803 = vadd.s32 %v798, %v794
            %v804 = vadd.s32 %v798, %v795
            %v805 = vadd.s32 %v798, %v796
            %v806 = vadd.s32 %v798, %v797
            %vm807 = vcmp.eq.s32.totalorder %v799, %v472
            %vm808 = vcmp.eq.s32.totalorder %v800, %v472
            %vm809 = vcmp.eq.s32.totalorder %v801, %v472
            %vm810 = vcmp.eq.s32.totalorder %v802, %v472
            %vm811 = vcmp.eq.s32.totalorder %v803, %v472
            %vm812 = vcmp.eq.s32.totalorder %v804, %v472
            %vm813 = vcmp.eq.s32.totalorder %v805, %v472
            %vm814 = vcmp.eq.s32.totalorder %v806, %v472
            %v815 = vsel %vm807, 128, %v765
            %v816 = vsel %vm808, 128, %v766
            %v817 = vsel %vm809, 128, %v767
            %v818 = vsel %vm810, 128, %v768
            %v819 = vsel %vm811, 128, %v769
            %v820 = vsel %vm812, 128, %v770
            %v821 = vsel %vm813, 128, %v771
            %v822 = vsel %vm814, 128, %v772
            %823 = vst [vmem:[%s421] sm:$0xff] %v815
            %824 = vst [vmem:[%s421 + $0x8] sm:$0xff] %v816
            %825 = vst [vmem:[%s421 + $0x10] sm:$0xff] %v817
            %826 = vst [vmem:[%s421 + $0x18] sm:$0xff] %v818
            %827 = vst [vmem:[%s421 + $0x20] sm:$0xff] %v819
            %828 = vst [vmem:[%s421 + $0x28] sm:$0xff] %v820
            %829 = vst [vmem:[%s421 + $0x30] sm:$0xff] %v821
            %830 = vst [vmem:[%s421 + $0x38] sm:$0xff] %v822
          $region60: #{tpu_custom_call.1} parent=55 // pred_fallthru
            _
        $region56: #{tpu_custom_call.1} parent=51 // pred_fallthru
          _
        // Predicated region
        $region61: #{tpu_custom_call.1} parent=51 // pred_check
          %p831 = pneg %p467
        $region62: #{tpu_custom_call.1} parent=51 // pred_check_branch
          %833 = sbr.rel (%p831) target = $region64
        $region63: #{tpu_custom_call.1} parent=51 // pred_region
          %834 = vst [vmem:[%s421] sm:$0xff] 128
          %835 = vst [vmem:[%s421 + $0x8] sm:$0xff] 128
          %836 = vst [vmem:[%s421 + $0x10] sm:$0xff] 128
          %837 = vst [vmem:[%s421 + $0x18] sm:$0xff] 128
          %838 = vst [vmem:[%s421 + $0x20] sm:$0xff] 128
          %839 = vst [vmem:[%s421 + $0x28] sm:$0xff] 128
          %840 = vst [vmem:[%s421 + $0x30] sm:$0xff] 128
          %841 = vst [vmem:[%s421 + $0x38] sm:$0xff] 128
        $region64: #{tpu_custom_call.1} parent=51 // pred_fallthru
          _
        %s842 = sand.u32 %s268, 1
        %s843 = scalar_lea.sflag [#allocation8], %s842
        %s844 = sand.u32 %s268, 1
        %s845 = smul.addr %s844, 64
        %s846 = scalar_lea.vmem [#allocation7], %s845
        // Predicated region
        $region65: #{tpu_custom_call.1} parent=51 // pred_check
          %p847 = pneg %p278
        $region66: #{tpu_custom_call.1} parent=51 // pred_check_branch
          %849 = sbr.rel (%p847) target = $region68
        $region67: #{tpu_custom_call.1} parent=51 // pred_region
          %s850 = smul.u32 8, %s42
          %s852 = ssub.s32 1024, 1024
          %853 = vsyncadd %s843, %s852
          %s854 = sadd.s32 %s43, %s850
          %s855 = smul.addr %s854, 128
          %s856 = scalar_lea.hbm %s12, %s855
          %s857 = sshll.u32 %s846, 4
          %s858 = int_to_ptr.vmem [resolvable:$true] %s857
          %863 = dma.vmem_to_hbm [thread:$0]  %s858, 1024, %s856, %s843, 128, 128, 8
        $region68: #{tpu_custom_call.1} parent=51 // pred_fallthru
          _
      $region52: #{tpu_custom_call.1} parent=5 // pred_fallthru
        _
      %p864 = scmp.le.s32.totalorder 2, %s33
      // Predicated region
      $region69: #{tpu_custom_call.1} parent=5 // pred_check
        %p865 = pneg %p864
      $region70: #{tpu_custom_call.1} parent=5 // pred_check_branch
        %867 = sbr.rel (%p865) target = $region72
      $region71: #{tpu_custom_call.1} parent=5 // pred_region
        %s868 = ssub.s32 %s33, 2
        // Predicated region
        $region73: #{tpu_custom_call.1} parent=71 // pred_check
          %p869 = pneg %p284
        $region74: #{tpu_custom_call.1} parent=71 // pred_check_branch
          %871 = sbr.rel (%p869) target = $region76
        $region75: #{tpu_custom_call.1} parent=71 // pred_region
          %s872 = sand.u32 %s269, 1
          %s873 = scalar_lea.sflag [#allocation8], %s872
          %s874 = sand.u32 %s269, 1
          %s875 = smul.addr %s874, 64
          %s876 = scalar_lea.vmem [#allocation7], %s875
          %877 = dma.done %s873, 1024
        $region76: #{tpu_custom_call.1} parent=71 // pred_fallthru
          _
      $region72: #{tpu_custom_call.1} parent=5 // pred_fallthru
        _
    $region6: #{tpu_custom_call.1} parent=1 // loop_footer
      %s37 = sadd.s32 1, %s33
    $region7: #{tpu_custom_call.1} parent=1 // loop_footer_branch
      %32 = sbr.rel target = $region3
    $region8: #{tpu_custom_call.1} parent=1 // loop_exit
      _
    %878 = vsyncpa [#allocation8], 1
    %s879 = scalar_lea.sflag [#allocation8], 1
    %880 = vsyncpa %s879, 1

</llo_original>
